<compile_context>
chip_gen: v7x
topology: tpu7x:2x2x1
jax: 0.10.0
libtpu: 0.0.40
codegen_flags: <defaults>
</compile_context>

<pallas_src>
import functools

import jax
import jax.numpy as jnp
from jax import lax
from jax.experimental import pallas as pl
from jax.experimental.pallas import tpu as pltpu

LANE = 128          # lane width
SUBLANE = 8         # sublane width
TRANS = 200         # transform width from the PyTorch module (Linear(_, 200))
HID_P = 256         # transform width padded to a clean MXU K/N
TB_MAX = 2048       # batch-tile cap (amortizes per-grid-step overhead)
X_TILE_BYTES = 8 << 20   # keep the (double-buffered) x tile under ~8 MiB


def _round_up(n, m):
    return ((n + m - 1) // m) * m


# ---------------------------------------------------------------------------
# Kernel
# ---------------------------------------------------------------------------
def _encoder_kernel(sig_off, split_heads,
                    x_ref, w1_ref, b1_ref, w2_ref, b2_ref, wh_ref, bh_ref,
                    out_ref):
    x = x_ref[...]

    # transform = Linear(in, 200) -> Tanh -> Linear(200, 200) -> Tanh (padded to 256)
    h1 = jnp.tanh(
        jnp.dot(x, w1_ref[...], preferred_element_type=jnp.float32) + b1_ref[...]
    )
    h2 = jnp.tanh(
        jnp.dot(h1, w2_ref[...], preferred_element_type=jnp.float32) + b2_ref[...]
    )

    # Fused heads: mu columns at [0, H), logsigma columns starting at sig_off.
    heads = (
        jnp.dot(h2, wh_ref[...], preferred_element_type=jnp.float32) + bh_ref[...]
    )

    if split_heads:
        # 2H > 128: mu group = lanes [0, sig_off), logsigma group =
        # [sig_off, 2*sig_off); both 128-lane aligned -> static slices,
        # no iota/select, and exp only touches the logsigma half.
        out_ref[:, :sig_off] = heads[:, :sig_off]
        out_ref[:, sig_off:] = jnp.exp(heads[:, sig_off:])
    else:
        # 2H <= 128: single lane group, keep the fused layout.  Broadcast a
        # (1, OUT_P) iota and guard exp's input so large mu never produces inf.
        col = lax.broadcasted_iota(jnp.int32, (1, heads.shape[1]), 1)
        is_sig = col >= sig_off
        out_ref[...] = jnp.where(is_sig,
                                 jnp.exp(jnp.where(is_sig, heads, 0.0)),
                                 heads)


# ---------------------------------------------------------------------------
# Parameter packing (done once, outside the per-call forward)
# ---------------------------------------------------------------------------
def pack_params(params, input_size, hidden_size):
    """Pad params to MXU/lane-friendly shapes and fuse the two heads.

    The input dim of w1 is kept UNPADDED so x never has to be padded in HBM.
    """
    H = hidden_size
    if 2 * H <= LANE:
        split = False
        sig_off = H                       # logsigma columns start right after mu
        out_p = LANE
    else:
        split = True
        sig_off = _round_up(H, LANE)      # logsigma group starts on a lane boundary
        out_p = 2 * sig_off

    def pad2(a, rows, cols):
        r, c = a.shape
        return jnp.pad(a, ((0, rows - r), (0, cols - c)))

    w1 = pad2(params["w1"], input_size, HID_P)   # (input_size, 256) -- input dim unpadded
    b1 = pad2(params["b1"], 1, HID_P)
    w2 = pad2(params["w2"], HID_P, HID_P)
    b2 = pad2(params["b2"], 1, HID_P)

    wh = jnp.zeros((HID_P, out_p), jnp.float32)
    wh = wh.at[:TRANS, :H].set(params["wmu"])
    wh = wh.at[:TRANS, sig_off:sig_off + H].set(params["wls"])
    bh = jnp.zeros((1, out_p), jnp.float32)
    bh = bh.at[:, :H].set(params["bmu"])
    bh = bh.at[:, sig_off:sig_off + H].set(params["bls"])

    return dict(w1=w1, b1=b1, w2=w2, b2=b2, wh=wh, bh=bh,
                input_size=input_size, hidden_size=hidden_size,
                sig_off=sig_off, out_p=out_p, split=split)


# ---------------------------------------------------------------------------
# Forward wrapper
# ---------------------------------------------------------------------------
def aiwae_encoder_forward(x, packed):
    """x: (B, input_size) float32.  Returns (mu, sigma) of shape (B, hidden)."""
    B, input_size = x.shape
    assert input_size == packed["input_size"]
    H = packed["hidden_size"]
    sig_off = packed["sig_off"]
    out_p = packed["out_p"]
    split = packed["split"]

    # Batch tile: big enough to amortize step overhead, but aim for >= 2 grid
    # steps so both v7x TensorCores get work; cap the x tile's VMEM footprint.
    tb = min(TB_MAX, _round_up(pl.cdiv(B, 2), SUBLANE))
    vmem_cap = max(SUBLANE,
                   (X_TILE_BYTES // (2 * 4 * input_size)) // SUBLANE * SUBLANE)
    tb = min(tb, vmem_cap)
    if tb >= B:
        tb = B   # single block; block dims == array dims is always legal
    grid = (pl.cdiv(B, tb),)   # ragged last block handled by Pallas (masked store)

    def resident(arr):  # weights/biases: constant block index -> stay in VMEM
        return pl.BlockSpec(arr.shape, lambda i: (0, 0))

    n_exp = (out_p - sig_off) if split else out_p
    cost = pl.CostEstimate(
        flops=2 * B * (input_size * HID_P + HID_P * HID_P + HID_P * out_p),
        transcendentals=B * (2 * HID_P + n_exp),
        bytes_accessed=4 * (B * (input_size + out_p)
                            + input_size * HID_P + HID_P * HID_P + HID_P * out_p
                            + 2 * HID_P + out_p),
    )

    out = pl.pallas_call(
        functools.partial(_encoder_kernel, sig_off, split),
        out_shape=jax.ShapeDtypeStruct((B, out_p), jnp.float32),
        grid=grid,
        in_specs=[
            pl.BlockSpec((tb, input_size), lambda i: (i, 0)),   # x: tiled, UNPADDED
            resident(packed["w1"]),
            resident(packed["b1"]),
            resident(packed["w2"]),
            resident(packed["b2"]),
            resident(packed["wh"]),
            resident(packed["bh"]),
        ],
        out_specs=pl.BlockSpec((tb, out_p), lambda i: (i, 0)),
        compiler_params=pltpu.CompilerParams(
            dimension_semantics=("parallel",)),
        cost_estimate=cost,
    )(x.astype(jnp.float32), packed["w1"], packed["b1"], packed["w2"],
      packed["b2"], packed["wh"], packed["bh"])

    mu = out[:, :H]
    sigma = out[:, sig_off:sig_off + H]
    return mu, sigma


# ---------------------------------------------------------------------------
# Param init + pure-JAX reference
# ---------------------------------------------------------------------------
def init_params(key, input_size, hidden_size):
    """PyTorch-style uniform(-1/sqrt(fan_in), 1/sqrt(fan_in)) init, weights
    stored as (in_features, out_features)."""
    def linear(key, fan_in, fan_out):
        kw, kb = jax.random.split(key)
        bound = 1.0 / jnp.sqrt(fan_in)
        w = jax.random.uniform(kw, (fan_in, fan_out), jnp.float32, -bound, bound)
        b = jax.random.uniform(kb, (1, fan_out), jnp.float32, -bound, bound)
        return w, b

    k1, k2, k3, k4 = jax.random.split(key, 4)
    w1, b1 = linear(k1, input_size, TRANS)
    w2, b2 = linear(k2, TRANS, TRANS)
    wmu, bmu = linear(k3, TRANS, hidden_size)
    wls, bls = linear(k4, TRANS, hidden_size)
    return dict(w1=w1, b1=b1, w2=w2, b2=b2,
                wmu=wmu, bmu=bmu, wls=wls, bls=bls)


def reference_forward(x, p):
    h1 = jnp.tanh(x @ p["w1"] + p["b1"])
    h2 = jnp.tanh(h1 @ p["w2"] + p["b2"])
    mu = h2 @ p["wmu"] + p["bmu"]
    sigma = jnp.exp(h2 @ p["wls"] + p["bls"])
    return mu, sigma


def _check(key, batch, input_size, hidden_size):
    kx, kp = jax.random.split(key)
    x = jax.random.normal(kx, (batch, input_size), jnp.float32)
    params = init_params(kp, input_size, hidden_size)
    packed = pack_params(params, input_size, hidden_size)

    mu, sigma = aiwae_encoder_forward(x, packed)
    jax.block_until_ready((mu, sigma))

    mu_ref, sigma_ref = reference_forward(x, params)
    assert mu.shape == (batch, hidden_size)
    assert sigma.shape == (batch, hidden_size)
    assert jnp.allclose(mu, mu_ref, atol=1e-5, rtol=1e-5)
    assert jnp.allclose(sigma, sigma_ref, atol=1e-5, rtol=1e-5)


if __name__ == "__main__":
    key = jax.random.PRNGKey(0)
    k1, k2 = jax.random.split(key)

    # Fused-head path (2H <= 128), single full-batch block.
    _check(k1, batch=8, input_size=32, hidden_size=16)
    # Split-head path (2H > 128), multi-step grid with a ragged last block.
    _check(k2, batch=20, input_size=48, hidden_size=96)

    print("KERNEL_OK")
</pallas_src>

<mosaic_0001>
module attributes {stable_mosaic.version = 11 : i64} {
  func.func @_encoder_kernel(%arg0: i32, %arg1: memref<8x32xf32, #tpu.memory_space<vmem>>, %arg2: memref<32x256xf32, #tpu.memory_space<vmem>>, %arg3: memref<1x256xf32, #tpu.memory_space<vmem>>, %arg4: memref<256x256xf32, #tpu.memory_space<vmem>>, %arg5: memref<1x256xf32, #tpu.memory_space<vmem>>, %arg6: memref<256x128xf32, #tpu.memory_space<vmem>>, %arg7: memref<1x128xf32, #tpu.memory_space<vmem>>, %arg8: memref<8x128xf32, #tpu.memory_space<vmem>>) attributes {dimension_semantics = [#tpu.dimension_semantics<parallel>], iteration_bounds = array<i64: 1>, scalar_prefetch = 0 : i64, scratch_operands = 0 : i64, tpu.core_type = #tpu.core_type<tc>, window_params = [{transform_indices = @transform_0, window_bounds = array<i64: 8, 32>}, {pipeline_mode = #tpu.pipeline_mode<synchronous>, transform_indices = @transform_1, window_bounds = array<i64: 32, 256>}, {pipeline_mode = #tpu.pipeline_mode<synchronous>, transform_indices = @transform_2, window_bounds = array<i64: 1, 256>}, {pipeline_mode = #tpu.pipeline_mode<synchronous>, transform_indices = @transform_3, window_bounds = array<i64: 256, 256>}, {pipeline_mode = #tpu.pipeline_mode<synchronous>, transform_indices = @transform_4, window_bounds = array<i64: 1, 256>}, {pipeline_mode = #tpu.pipeline_mode<synchronous>, transform_indices = @transform_5, window_bounds = array<i64: 256, 128>}, {pipeline_mode = #tpu.pipeline_mode<synchronous>, transform_indices = @transform_6, window_bounds = array<i64: 1, 128>}, {transform_indices = @transform_7, window_bounds = array<i64: 8, 128>}]} {
    %c0 = arith.constant 0 : index
    %c0_0 = arith.constant 0 : index
    %0 = vector.load %arg1[%c0, %c0_0] : memref<8x32xf32, #tpu.memory_space<vmem>>, vector<8x32xf32>
    %c0_1 = arith.constant 0 : index
    %c0_2 = arith.constant 0 : index
    %1 = vector.load %arg2[%c0_1, %c0_2] : memref<32x256xf32, #tpu.memory_space<vmem>>, vector<32x256xf32>
    %cst = arith.constant dense<0.000000e+00> : vector<8x256xf32>
    %2 = tpu.matmul %0, %1, %cst {dimension_numbers = #tpu.dot_dimension_numbers<[1], [0], [0], [1], [0, 0, 1, 1], [], []>} : vector<8x32xf32>, vector<32x256xf32>, vector<8x256xf32> -> vector<8x256xf32>
    %c0_3 = arith.constant 0 : index
    %c0_4 = arith.constant 0 : index
    %3 = vector.load %arg3[%c0_3, %c0_4] : memref<1x256xf32, #tpu.memory_space<vmem>>, vector<1x256xf32>
    %4 = vector.broadcast %3 : vector<1x256xf32> to vector<8x256xf32>
    %5 = arith.addf %2, %4 : vector<8x256xf32>
    %6 = math.tanh %5 : vector<8x256xf32>
    %c0_5 = arith.constant 0 : index
    %c0_6 = arith.constant 0 : index
    %7 = vector.load %arg4[%c0_5, %c0_6] : memref<256x256xf32, #tpu.memory_space<vmem>>, vector<256x256xf32>
    %cst_7 = arith.constant dense<0.000000e+00> : vector<8x256xf32>
    %8 = tpu.matmul %6, %7, %cst_7 {dimension_numbers = #tpu.dot_dimension_numbers<[1], [0], [0], [1], [0, 0, 1, 1], [], []>} : vector<8x256xf32>, vector<256x256xf32>, vector<8x256xf32> -> vector<8x256xf32>
    %c0_8 = arith.constant 0 : index
    %c0_9 = arith.constant 0 : index
    %9 = vector.load %arg5[%c0_8, %c0_9] : memref<1x256xf32, #tpu.memory_space<vmem>>, vector<1x256xf32>
    %10 = vector.broadcast %9 : vector<1x256xf32> to vector<8x256xf32>
    %11 = arith.addf %8, %10 : vector<8x256xf32>
    %12 = math.tanh %11 : vector<8x256xf32>
    %c0_10 = arith.constant 0 : index
    %c0_11 = arith.constant 0 : index
    %13 = vector.load %arg6[%c0_10, %c0_11] : memref<256x128xf32, #tpu.memory_space<vmem>>, vector<256x128xf32>
    %cst_12 = arith.constant dense<0.000000e+00> : vector<8x128xf32>
    %14 = tpu.matmul %12, %13, %cst_12 {dimension_numbers = #tpu.dot_dimension_numbers<[1], [0], [0], [1], [0, 0, 1, 1], [], []>} : vector<8x256xf32>, vector<256x128xf32>, vector<8x128xf32> -> vector<8x128xf32>
    %c0_13 = arith.constant 0 : index
    %c0_14 = arith.constant 0 : index
    %15 = vector.load %arg7[%c0_13, %c0_14] : memref<1x128xf32, #tpu.memory_space<vmem>>, vector<1x128xf32>
    %16 = vector.broadcast %15 : vector<1x128xf32> to vector<8x128xf32>
    %17 = arith.addf %14, %16 : vector<8x128xf32>
    %18 = tpu.iota {dimensions = array<i32: 1>} : vector<1x128xi32>
    %c16_i32 = arith.constant 16 : i32
    %19 = vector.broadcast %c16_i32 : i32 to vector<1x128xi32>
    %20 = arith.cmpi sge, %18, %19 : vector<1x128xi32>
    %cst_15 = arith.constant 0.000000e+00 : f32
    %21 = vector.shape_cast %20 : vector<1x128xi1> to vector<1x128xi1>
    %22 = vector.broadcast %21 : vector<1x128xi1> to vector<8x128xi1>
    %23 = vector.broadcast %cst_15 : f32 to vector<8x128xf32>
    %24 = arith.select %22, %17, %23 : vector<8x128xi1>, vector<8x128xf32>
    %25 = math.exp %24 : vector<8x128xf32>
    %26 = vector.shape_cast %20 : vector<1x128xi1> to vector<1x128xi1>
    %27 = vector.broadcast %26 : vector<1x128xi1> to vector<8x128xi1>
    %28 = arith.select %27, %25, %17 : vector<8x128xi1>, vector<8x128xf32>
    %c0_16 = arith.constant 0 : index
    %c0_17 = arith.constant 0 : index
    %29 = vector.load %arg8[%c0_16, %c0_17] : memref<8x128xf32, #tpu.memory_space<vmem>>, vector<8x128xf32>
    tpu.vector_store %arg8[%c0_16, %c0_17], %28 {strides = array<i32>} : memref<8x128xf32, #tpu.memory_space<vmem>>, vector<8x128xf32>,
    return
  }
  func.func @transform_0(%arg0: i32) -> (i32, i32) {
    %c0_i32 = arith.constant 0 : i32
    %c0_i32_0 = arith.constant 0 : i32
    return %arg0, %c0_i32 : i32, i32
  }
  func.func @transform_1(%arg0: i32) -> (i32, i32) {
    %c0_i32 = arith.constant 0 : i32
    %c0_i32_0 = arith.constant 0 : i32
    %c0_i32_1 = arith.constant 0 : i32
    return %c0_i32, %c0_i32_0 : i32, i32
  }
  func.func @transform_2(%arg0: i32) -> (i32, i32) {
    %c0_i32 = arith.constant 0 : i32
    %c0_i32_0 = arith.constant 0 : i32
    %c0_i32_1 = arith.constant 0 : i32
    return %c0_i32, %c0_i32_0 : i32, i32
  }
  func.func @transform_3(%arg0: i32) -> (i32, i32) {
    %c0_i32 = arith.constant 0 : i32
    %c0_i32_0 = arith.constant 0 : i32
    %c0_i32_1 = arith.constant 0 : i32
    return %c0_i32, %c0_i32_0 : i32, i32
  }
  func.func @transform_4(%arg0: i32) -> (i32, i32) {
    %c0_i32 = arith.constant 0 : i32
    %c0_i32_0 = arith.constant 0 : i32
    %c0_i32_1 = arith.constant 0 : i32
    return %c0_i32, %c0_i32_0 : i32, i32
  }
  func.func @transform_5(%arg0: i32) -> (i32, i32) {
    %c0_i32 = arith.constant 0 : i32
    %c0_i32_0 = arith.constant 0 : i32
    %c0_i32_1 = arith.constant 0 : i32
    return %c0_i32, %c0_i32_0 : i32, i32
  }
  func.func @transform_6(%arg0: i32) -> (i32, i32) {
    %c0_i32 = arith.constant 0 : i32
    %c0_i32_0 = arith.constant 0 : i32
    %c0_i32_1 = arith.constant 0 : i32
    return %c0_i32, %c0_i32_0 : i32, i32
  }
  func.func @transform_7(%arg0: i32) -> (i32, i32) {
    %c0_i32 = arith.constant 0 : i32
    %c0_i32_0 = arith.constant 0 : i32
    return %arg0, %c0_i32 : i32, i32
  }
}

</mosaic_0001>

<llo_original>
// kernel: tpu_custom_call.1
$region0: #{tpu_custom_call.1}
  #allocation0 [shape = 'u32[]', space=smem, size = 0x4, offset = 0x4, fixed_abs, tag = 'smem constant byte address 0x4 - core index']
  #allocation1 [shape = 'u32[144,128]{1,0:T(1,128)}', space=vmem, size = 0x12000, scoped, tag = 'internal scratch']
  %s0 = inlined_call_operand.hbm [shape: f32[8,32], index: 0, kind: input, shape index: {}]
  %s1 = inlined_call_operand.hbm [shape: f32[32,256], index: 1, kind: input, shape index: {}]
  %s2 = inlined_call_operand.vmem [shape: f32[1,256], index: 2, kind: input, shape index: {}]
  %s3 = inlined_call_operand.hbm [shape: f32[256,256], index: 3, kind: input, shape index: {}]
  %s4 = inlined_call_operand.vmem [shape: f32[1,256], index: 4, kind: input, shape index: {}]
  %s5 = inlined_call_operand.hbm [shape: f32[256,128], index: 5, kind: input, shape index: {}]
  %s6 = inlined_call_operand.vmem [shape: f32[1,128], index: 6, kind: input, shape index: {}]
  %s7 = inlined_call_operand.hbm [shape: f32[8,128], index: 7, kind: output, shape index: {}]
  %s8 = sld [smem:[#allocation0]]
  $region54: #{tpu_custom_call.1} parent=0
    _
  %s10 = ssub.s32 1, %s8
  %s11 = scalar_select 0, %s10, %s8
  $region1: #{tpu_custom_call.1} parent=0
    #allocation2 [shape = 'u8[4096]{0}', space=vmem, size = 0x1000, scoped, tag = 'input window, operand 0, single buffered']
    #allocation3 [shape = 's32[1]{0}', space=sflag, size = 0x4, scoped, tag = 'scoped memory for tpu_custom_call.1']
    #allocation4 [shape = 's32[1]{0}', space=sflag, size = 0x4, scoped, tag = 'scoped memory for tpu_custom_call.1']
    #allocation5 [shape = 'u8[32768]{0}', space=vmem, size = 0x8000, scoped, tag = 'input window, operand 1, single buffered']
    #allocation6 [shape = 's32[1]{0}', space=sflag, size = 0x4, scoped, tag = 'scoped memory for tpu_custom_call.1']
    #allocation7 [shape = 'u8[262144]{0}', space=vmem, size = 0x40000, scoped, tag = 'input window, operand 3, single buffered']
    #allocation8 [shape = 'u8[131072]{0}', space=vmem, size = 0x20000, scoped, tag = 'input window, operand 5, single buffered']
    #allocation9 [shape = 's32[1]{0}', space=sflag, size = 0x4, scoped, tag = 'scoped memory for tpu_custom_call.1']
    #allocation10 [shape = 'u8[4096]{0}', space=vmem, size = 0x1000, scoped, tag = 'output window, operand 0, single buffered']
    %12 = vsyncpa [#allocation3], 0
    %13 = vsyncpa [#allocation6], 0
    %14 = vsyncpa [#allocation9], 0
    %15 = vsyncpa [#allocation4], 0
    // Predicated region
    $region2: #{tpu_custom_call.1} parent=1 // pred_check
      _
    $region3: #{tpu_custom_call.1} parent=1 // pred_check_branch
      %17 = sbr.rel (0) target = $region5
    $region4: #{tpu_custom_call.1} parent=1 // pred_region
      %s19 = ssub.s32 128, 128
      %20 = vsyncadd [#allocation3], %s19
      %s22 = sshll.u32 [#allocation2], 4
      %s23 = int_to_ptr.vmem [resolvable:$true] %s22
      %25 = dma.hbm_to_vmem [thread:$0]  %s0, 128, %s23, [#allocation3]
    $region5: #{tpu_custom_call.1} parent=1 // pred_fallthru
      _
    // Predicated region
    $region6: #{tpu_custom_call.1} parent=1 // pred_check
      _
    $region7: #{tpu_custom_call.1} parent=1 // pred_check_branch
      %27 = sbr.rel (0) target = $region9
    $region8: #{tpu_custom_call.1} parent=1 // pred_region
      %s29 = ssub.s32 1024, 1024
      %30 = vsyncadd [#allocation6], %s29
      %s31 = sshll.u32 [#allocation5], 4
      %s32 = int_to_ptr.vmem [resolvable:$true] %s31
      %37 = dma.hbm_to_vmem [thread:$0]  %s1, 1024, %s32, [#allocation6], 256, 256, 16
    $region9: #{tpu_custom_call.1} parent=1 // pred_fallthru
      _
    // Predicated region
    $region10: #{tpu_custom_call.1} parent=1 // pred_check
      _
    $region11: #{tpu_custom_call.1} parent=1 // pred_check_branch
      %39 = sbr.rel (0) target = $region13
    $region12: #{tpu_custom_call.1} parent=1 // pred_region
      _
    $region13: #{tpu_custom_call.1} parent=1 // pred_fallthru
      _
    // Predicated region
    $region14: #{tpu_custom_call.1} parent=1 // pred_check
      _
    $region15: #{tpu_custom_call.1} parent=1 // pred_check_branch
      %41 = sbr.rel (0) target = $region17
    $region16: #{tpu_custom_call.1} parent=1 // pred_region
      %s43 = ssub.s32 8192, 8192
      %44 = vsyncadd [#allocation6], %s43
      %s45 = sshll.u32 [#allocation7], 4
      %s46 = int_to_ptr.vmem [resolvable:$true] %s45
      %51 = dma.hbm_to_vmem [thread:$0]  %s3, 8192, %s46, [#allocation6], 256, 256, 16
    $region17: #{tpu_custom_call.1} parent=1 // pred_fallthru
      _
    // Predicated region
    $region18: #{tpu_custom_call.1} parent=1 // pred_check
      _
    $region19: #{tpu_custom_call.1} parent=1 // pred_check_branch
      %53 = sbr.rel (0) target = $region21
    $region20: #{tpu_custom_call.1} parent=1 // pred_region
      _
    $region21: #{tpu_custom_call.1} parent=1 // pred_fallthru
      _
    // Predicated region
    $region22: #{tpu_custom_call.1} parent=1 // pred_check
      _
    $region23: #{tpu_custom_call.1} parent=1 // pred_check_branch
      %55 = sbr.rel (0) target = $region25
    $region24: #{tpu_custom_call.1} parent=1 // pred_region
      %s57 = ssub.s32 4096, 4096
      %58 = vsyncadd [#allocation9], %s57
      %s59 = sshll.u32 [#allocation8], 4
      %s60 = int_to_ptr.vmem [resolvable:$true] %s59
      %65 = dma.hbm_to_vmem [thread:$0]  %s5, 4096, %s60, [#allocation9], 128, 128, 8
    $region25: #{tpu_custom_call.1} parent=1 // pred_fallthru
      _
    // Predicated region
    $region26: #{tpu_custom_call.1} parent=1 // pred_check
      _
    $region27: #{tpu_custom_call.1} parent=1 // pred_check_branch
      %67 = sbr.rel (0) target = $region29
    $region28: #{tpu_custom_call.1} parent=1 // pred_region
      _
    $region29: #{tpu_custom_call.1} parent=1 // pred_fallthru
      _
    // Predicated region
    $region30: #{tpu_custom_call.1} parent=1 // pred_check
      _
    $region31: #{tpu_custom_call.1} parent=1 // pred_check_branch
      %69 = sbr.rel (0) target = $region33
    $region32: #{tpu_custom_call.1} parent=1 // pred_region
      %70 = dma.done [#allocation3], 128
    $region33: #{tpu_custom_call.1} parent=1 // pred_fallthru
      _
    // Predicated region
    $region34: #{tpu_custom_call.1} parent=1 // pred_check
      _
    $region35: #{tpu_custom_call.1} parent=1 // pred_check_branch
      %72 = sbr.rel (0) target = $region37
    $region36: #{tpu_custom_call.1} parent=1 // pred_region
      %73 = dma.done [#allocation6], 1024
    $region37: #{tpu_custom_call.1} parent=1 // pred_fallthru
      _
    // Predicated region
    $region38: #{tpu_custom_call.1} parent=1 // pred_check
      _
    $region39: #{tpu_custom_call.1} parent=1 // pred_check_branch
      %75 = sbr.rel (0) target = $region41
    $region40: #{tpu_custom_call.1} parent=1 // pred_region
      %76 = dma.done [#allocation6], 8192
    $region41: #{tpu_custom_call.1} parent=1 // pred_fallthru
      _
    // Predicated region
    $region42: #{tpu_custom_call.1} parent=1 // pred_check
      _
    $region43: #{tpu_custom_call.1} parent=1 // pred_check_branch
      %78 = sbr.rel (0) target = $region45
    $region44: #{tpu_custom_call.1} parent=1 // pred_region
      %79 = dma.done [#allocation9], 4096
    $region45: #{tpu_custom_call.1} parent=1 // pred_fallthru
      _
    %v80 = vld [vmem:[#allocation2] sm:$0xff]
    %v81 = vld [vmem:[#allocation5] sm:$0xff]
    %v82 = vld [vmem:[#allocation5 + $0x8] sm:$0xff]
    %v83 = vld [vmem:[#allocation5 + $0x10] sm:$0xff]
    %v84 = vld [vmem:[#allocation5 + $0x18] sm:$0xff]
    %v85 = vld [vmem:[#allocation5 + $0x20] sm:$0xff]
    %v86 = vld [vmem:[#allocation5 + $0x28] sm:$0xff]
    %v87 = vld [vmem:[#allocation5 + $0x30] sm:$0xff]
    %v88 = vld [vmem:[#allocation5 + $0x38] sm:$0xff]
    %v89 = vld [vmem:[%s2] sm:$0x3]
    %v91 = vlaneseq
    %v92 = vshrl.u32 %v91, 7
    %v93 = vsub.s32 0, %v92
    %v94 = vrot.slane %v89, %v93
    %v95 = vlaneseq
    %v96 = vshrl.u32 %v95, 7
    %v97 = vsub.s32 1, %v96
    %v98 = vrot.slane %v89, %v97
    %vm101 = vcmask 261120
    %v103 = vsel %vm101, %v80, 0
    %105 = vmatprep.subr.mxu0 %v82
    %106 = vmatpush1.msra.mxu0 %v81
    %107 = vmatprep.subr.mxu0 %v84
    %108 = vmatpush1.msra.mxu0 %v83
    %109 = vmatprep.subr.mxu0 %v86
    %110 = vmatpush1.msra.mxu0 %v85
    %111 = vmatprep.subr.mxu0 %v88
    %112 = vmatpush1.msra.mxu0 %v87
    %113 = vmatprep.subr.mxu0 0.0
    %114 = vmatpush1.msra.mxu0 0.0
    %115 = vmatprep.subr.mxu0 0.0
    %116 = vmatpush1.msra.mxu0 0.0
    %117 = vmatprep.subr.mxu0 0.0
    %118 = vmatpush1.msra.mxu0 0.0
    %119 = vmatprep.subr.mxu0 0.0
    %120 = vmatpush1.msra.mxu0 0.0
    %121 = vmatprep.subr.mxu0 0.0
    %122 = vmatpush1.msra.mxu0 0.0
    %123 = vmatprep.subr.mxu0 0.0
    %124 = vmatpush1.msra.mxu0 0.0
    %125 = vmatprep.subr.mxu0 0.0
    %126 = vmatpush1.msra.mxu0 0.0
    %127 = vmatprep.subr.mxu0 0.0
    %128 = vmatpush1.msra.mxu0 0.0
    %129 = vmatprep.subr.mxu0 0.0
    %130 = vmatpush1.msra.mxu0 0.0
    %131 = vmatprep.subr.mxu0 0.0
    %132 = vmatpush1.msra.mxu0 0.0
    %133 = vmatprep.subr.mxu0 0.0
    %134 = vmatpush1.msra.mxu0 0.0
    %135 = vmatprep.subr.mxu0 0.0
    %136 = vmatpush1.msra.mxu0 0.0
    %137 = vmatprep.subr.mxu0 0.0
    %138 = vmatpush1.msra.mxu0 0.0
    %139 = vmatprep.subr.mxu0 0.0
    %140 = vmatpush1.msra.mxu0 0.0
    %141 = vmatprep.subr.mxu0 0.0
    %142 = vmatpush1.msra.mxu0 0.0
    %143 = vmatprep.subr.mxu0 0.0
    %144 = vmatpush1.msra.mxu0 0.0
    %145 = vmatprep.subr.mxu0 0.0
    %146 = vmatpush1.msra.mxu0 0.0
    %147 = vmatprep.subr.mxu0 0.0
    %148 = vmatpush1.msra.mxu0 0.0
    %149 = vmatprep.subr.mxu0 0.0
    %150 = vmatpush1.msra.mxu0 0.0
    %151 = vmatprep.subr.mxu0 0.0
    %152 = vmatpush1.msra.mxu0 0.0
    %153 = vmatprep.subr.mxu0 0.0
    %154 = vmatpush1.msra.mxu0 0.0
    %155 = vmatprep.subr.mxu0 0.0
    %156 = vmatpush1.msra.mxu0 0.0
    %157 = vmatprep.subr.mxu0 0.0
    %158 = vmatpush1.msra.mxu0 0.0
    %159 = vmatprep.subr.mxu0 0.0
    %160 = vmatpush1.msra.mxu0 0.0
    %161 = vmatprep.subr.mxu0 0.0
    %162 = vmatpush1.msra.mxu0 0.0
    %163 = vmatprep.subr.mxu0 0.0
    %164 = vmatpush1.msra.mxu0 0.0
    %165 = vmatprep.subr.mxu0 0.0
    %166 = vmatpush1.msra.mxu0 0.0
    %167 = vmatprep.subr.mxu0 0.0
    %168 = vmatpush1.msra.mxu0 0.0
    %169 = vmatprep.mubr.f32.mxu0 0.0
    %170 = vmatmul.mubr.f32.gmra.mrb[0].mxu0 %v103
    %v171 = vpop.f32.mrb[0].mxu0
    %v172 = vadd.f32 %v94, %v171
    %v173 = vpop.f32.mrb[0].mxu0
    %v174 = vadd.f32 %v98, %v173
    %175 = vdwg.mxu0
    %v176 = vtanh.pop %v172
    %v177 = vtanh.pop %v174
    %v178 = vld [vmem:[#allocation7] sm:$0xff]
    %v179 = vld [vmem:[#allocation7 + $0x8] sm:$0xff]
    %v180 = vld [vmem:[#allocation7 + $0x10] sm:$0xff]
    %v181 = vld [vmem:[#allocation7 + $0x18] sm:$0xff]
    %v182 = vld [vmem:[#allocation7 + $0x20] sm:$0xff]
    %v183 = vld [vmem:[#allocation7 + $0x28] sm:$0xff]
    %v184 = vld [vmem:[#allocation7 + $0x30] sm:$0xff]
    %v185 = vld [vmem:[#allocation7 + $0x38] sm:$0xff]
    %v186 = vld [vmem:[#allocation7 + $0x40] sm:$0xff]
    %v187 = vld [vmem:[#allocation7 + $0x48] sm:$0xff]
    %v188 = vld [vmem:[#allocation7 + $0x50] sm:$0xff]
    %v189 = vld [vmem:[#allocation7 + $0x58] sm:$0xff]
    %v190 = vld [vmem:[#allocation7 + $0x60] sm:$0xff]
    %v191 = vld [vmem:[#allocation7 + $0x68] sm:$0xff]
    %v192 = vld [vmem:[#allocation7 + $0x70] sm:$0xff]
    %v193 = vld [vmem:[#allocation7 + $0x78] sm:$0xff]
    %v194 = vld [vmem:[#allocation7 + $0x80] sm:$0xff]
    %v195 = vld [vmem:[#allocation7 + $0x88] sm:$0xff]
    %v196 = vld [vmem:[#allocation7 + $0x90] sm:$0xff]
    %v197 = vld [vmem:[#allocation7 + $0x98] sm:$0xff]
    %v198 = vld [vmem:[#allocation7 + $0xa0] sm:$0xff]
    %v199 = vld [vmem:[#allocation7 + $0xa8] sm:$0xff]
    %v200 = vld [vmem:[#allocation7 + $0xb0] sm:$0xff]
    %v201 = vld [vmem:[#allocation7 + $0xb8] sm:$0xff]
    %v202 = vld [vmem:[#allocation7 + $0xc0] sm:$0xff]
    %v203 = vld [vmem:[#allocation7 + $0xc8] sm:$0xff]
    %v204 = vld [vmem:[#allocation7 + $0xd0] sm:$0xff]
    %v205 = vld [vmem:[#allocation7 + $0xd8] sm:$0xff]
    %v206 = vld [vmem:[#allocation7 + $0xe0] sm:$0xff]
    %v207 = vld [vmem:[#allocation7 + $0xe8] sm:$0xff]
    %v208 = vld [vmem:[#allocation7 + $0xf0] sm:$0xff]
    %v209 = vld [vmem:[#allocation7 + $0xf8] sm:$0xff]
    %v210 = vld [vmem:[#allocation7 + $0x100] sm:$0xff]
    %v211 = vld [vmem:[#allocation7 + $0x108] sm:$0xff]
    %v212 = vld [vmem:[#allocation7 + $0x110] sm:$0xff]
    %v213 = vld [vmem:[#allocation7 + $0x118] sm:$0xff]
    %v214 = vld [vmem:[#allocation7 + $0x120] sm:$0xff]
    %v215 = vld [vmem:[#allocation7 + $0x128] sm:$0xff]
    %v216 = vld [vmem:[#allocation7 + $0x130] sm:$0xff]
    %v217 = vld [vmem:[#allocation7 + $0x138] sm:$0xff]
    %v218 = vld [vmem:[#allocation7 + $0x140] sm:$0xff]
    %v219 = vld [vmem:[#allocation7 + $0x148] sm:$0xff]
    %v220 = vld [vmem:[#allocation7 + $0x150] sm:$0xff]
    %v221 = vld [vmem:[#allocation7 + $0x158] sm:$0xff]
    %v222 = vld [vmem:[#allocation7 + $0x160] sm:$0xff]
    %v223 = vld [vmem:[#allocation7 + $0x168] sm:$0xff]
    %v224 = vld [vmem:[#allocation7 + $0x170] sm:$0xff]
    %v225 = vld [vmem:[#allocation7 + $0x178] sm:$0xff]
    %v226 = vld [vmem:[#allocation7 + $0x180] sm:$0xff]
    %v227 = vld [vmem:[#allocation7 + $0x188] sm:$0xff]
    %v228 = vld [vmem:[#allocation7 + $0x190] sm:$0xff]
    %v229 = vld [vmem:[#allocation7 + $0x198] sm:$0xff]
    %v230 = vld [vmem:[#allocation7 + $0x1a0] sm:$0xff]
    %v231 = vld [vmem:[#allocation7 + $0x1a8] sm:$0xff]
    %v232 = vld [vmem:[#allocation7 + $0x1b0] sm:$0xff]
    %v233 = vld [vmem:[#allocation7 + $0x1b8] sm:$0xff]
    %v234 = vld [vmem:[#allocation7 + $0x1c0] sm:$0xff]
    %v235 = vld [vmem:[#allocation7 + $0x1c8] sm:$0xff]
    %v236 = vld [vmem:[#allocation7 + $0x1d0] sm:$0xff]
    %v237 = vld [vmem:[#allocation7 + $0x1d8] sm:$0xff]
    %v238 = vld [vmem:[#allocation7 + $0x1e0] sm:$0xff]
    %v239 = vld [vmem:[#allocation7 + $0x1e8] sm:$0xff]
    %v240 = vld [vmem:[#allocation7 + $0x1f0] sm:$0xff]
    %v241 = vld [vmem:[#allocation7 + $0x1f8] sm:$0xff]
    %v242 = vld [vmem:[%s4] sm:$0x3]
    %v244 = vlaneseq
    %v245 = vshrl.u32 %v244, 7
    %v246 = vsub.s32 0, %v245
    %v247 = vrot.slane %v242, %v246
    %v248 = vlaneseq
    %v249 = vshrl.u32 %v248, 7
    %v250 = vsub.s32 1, %v249
    %v251 = vrot.slane %v242, %v250
    %254 = vmatprep.subr.mxu0 %v179
    %255 = vmatpush1.msra.mxu0 %v178
    %256 = vmatprep.subr.mxu0 %v181
    %257 = vmatpush1.msra.mxu0 %v180
    %258 = vmatprep.subr.mxu0 %v183
    %259 = vmatpush1.msra.mxu0 %v182
    %260 = vmatprep.subr.mxu0 %v185
    %261 = vmatpush1.msra.mxu0 %v184
    %262 = vmatprep.subr.mxu0 %v187
    %263 = vmatpush1.msra.mxu0 %v186
    %264 = vmatprep.subr.mxu0 %v189
    %265 = vmatpush1.msra.mxu0 %v188
    %266 = vmatprep.subr.mxu0 %v191
    %267 = vmatpush1.msra.mxu0 %v190
    %268 = vmatprep.subr.mxu0 %v193
    %269 = vmatpush1.msra.mxu0 %v192
    %270 = vmatprep.subr.mxu0 %v195
    %271 = vmatpush1.msra.mxu0 %v194
    %272 = vmatprep.subr.mxu0 %v197
    %273 = vmatpush1.msra.mxu0 %v196
    %274 = vmatprep.subr.mxu0 %v199
    %275 = vmatpush1.msra.mxu0 %v198
    %276 = vmatprep.subr.mxu0 %v201
    %277 = vmatpush1.msra.mxu0 %v200
    %278 = vmatprep.subr.mxu0 %v203
    %279 = vmatpush1.msra.mxu0 %v202
    %280 = vmatprep.subr.mxu0 %v205
    %281 = vmatpush1.msra.mxu0 %v204
    %282 = vmatprep.subr.mxu0 %v207
    %283 = vmatpush1.msra.mxu0 %v206
    %284 = vmatprep.subr.mxu0 %v209
    %285 = vmatpush1.msra.mxu0 %v208
    %286 = vmatprep.subr.mxu0 %v211
    %287 = vmatpush1.msra.mxu0 %v210
    %288 = vmatprep.subr.mxu0 %v213
    %289 = vmatpush1.msra.mxu0 %v212
    %290 = vmatprep.subr.mxu0 %v215
    %291 = vmatpush1.msra.mxu0 %v214
    %292 = vmatprep.subr.mxu0 %v217
    %293 = vmatpush1.msra.mxu0 %v216
    %294 = vmatprep.subr.mxu0 %v219
    %295 = vmatpush1.msra.mxu0 %v218
    %296 = vmatprep.subr.mxu0 %v221
    %297 = vmatpush1.msra.mxu0 %v220
    %298 = vmatprep.subr.mxu0 %v223
    %299 = vmatpush1.msra.mxu0 %v222
    %300 = vmatprep.subr.mxu0 %v225
    %301 = vmatpush1.msra.mxu0 %v224
    %302 = vmatprep.subr.mxu0 %v227
    %303 = vmatpush1.msra.mxu0 %v226
    %304 = vmatprep.subr.mxu0 %v229
    %305 = vmatpush1.msra.mxu0 %v228
    %306 = vmatprep.subr.mxu0 %v231
    %307 = vmatpush1.msra.mxu0 %v230
    %308 = vmatprep.subr.mxu0 %v233
    %309 = vmatpush1.msra.mxu0 %v232
    %310 = vmatprep.subr.mxu0 %v235
    %311 = vmatpush1.msra.mxu0 %v234
    %312 = vmatprep.subr.mxu0 %v237
    %313 = vmatpush1.msra.mxu0 %v236
    %314 = vmatprep.subr.mxu0 %v239
    %315 = vmatpush1.msra.mxu0 %v238
    %316 = vmatprep.subr.mxu0 %v241
    %317 = vmatpush1.msra.mxu0 %v240
    %318 = vmatprep.mubr.f32.mxu0 %v177
    %319 = vmatmul.mubr.f32.gmra.mrb[0].mxu0 %v176
    %v320 = vpop.f32.mrb[0].mxu0
    %v321 = vadd.f32 %v247, %v320
    %v322 = vpop.f32.mrb[0].mxu0
    %v323 = vadd.f32 %v251, %v322
    %324 = vdwg.mxu0
    %v325 = vtanh.pop %v321
    %v326 = vtanh.pop %v323
    %v327 = vld [vmem:[#allocation8] sm:$0xff]
    %v328 = vld [vmem:[#allocation8 + $0x8] sm:$0xff]
    %v329 = vld [vmem:[#allocation8 + $0x10] sm:$0xff]
    %v330 = vld [vmem:[#allocation8 + $0x18] sm:$0xff]
    %v331 = vld [vmem:[#allocation8 + $0x20] sm:$0xff]
    %v332 = vld [vmem:[#allocation8 + $0x28] sm:$0xff]
    %v333 = vld [vmem:[#allocation8 + $0x30] sm:$0xff]
    %v334 = vld [vmem:[#allocation8 + $0x38] sm:$0xff]
    %v335 = vld [vmem:[#allocation8 + $0x40] sm:$0xff]
    %v336 = vld [vmem:[#allocation8 + $0x48] sm:$0xff]
    %v337 = vld [vmem:[#allocation8 + $0x50] sm:$0xff]
    %v338 = vld [vmem:[#allocation8 + $0x58] sm:$0xff]
    %v339 = vld [vmem:[#allocation8 + $0x60] sm:$0xff]
    %v340 = vld [vmem:[#allocation8 + $0x68] sm:$0xff]
    %v341 = vld [vmem:[#allocation8 + $0x70] sm:$0xff]
    %v342 = vld [vmem:[#allocation8 + $0x78] sm:$0xff]
    %v343 = vld [vmem:[#allocation8 + $0x80] sm:$0xff]
    %v344 = vld [vmem:[#allocation8 + $0x88] sm:$0xff]
    %v345 = vld [vmem:[#allocation8 + $0x90] sm:$0xff]
    %v346 = vld [vmem:[#allocation8 + $0x98] sm:$0xff]
    %v347 = vld [vmem:[#allocation8 + $0xa0] sm:$0xff]
    %v348 = vld [vmem:[#allocation8 + $0xa8] sm:$0xff]
    %v349 = vld [vmem:[#allocation8 + $0xb0] sm:$0xff]
    %v350 = vld [vmem:[#allocation8 + $0xb8] sm:$0xff]
    %v351 = vld [vmem:[#allocation8 + $0xc0] sm:$0xff]
    %v352 = vld [vmem:[#allocation8 + $0xc8] sm:$0xff]
    %v353 = vld [vmem:[#allocation8 + $0xd0] sm:$0xff]
    %v354 = vld [vmem:[#allocation8 + $0xd8] sm:$0xff]
    %v355 = vld [vmem:[#allocation8 + $0xe0] sm:$0xff]
    %v356 = vld [vmem:[#allocation8 + $0xe8] sm:$0xff]
    %v357 = vld [vmem:[#allocation8 + $0xf0] sm:$0xff]
    %v358 = vld [vmem:[#allocation8 + $0xf8] sm:$0xff]
    %v359 = vld [vmem:[%s6] sm:$0x1]
    %v361 = vlaneseq
    %v362 = vshrl.u32 %v361, 7
    %v363 = vsub.s32 0, %v362
    %v364 = vrot.slane %v359, %v363
    %366 = vmatprep.subr.mxu0 0.0
    %367 = vmatpush1.msra.mxu0 %v327
    %368 = vmatprep.subr.mxu0 0.0
    %369 = vmatpush1.msra.mxu0 %v328
    %370 = vmatprep.subr.mxu0 0.0
    %371 = vmatpush1.msra.mxu0 %v329
    %372 = vmatprep.subr.mxu0 0.0
    %373 = vmatpush1.msra.mxu0 %v330
    %374 = vmatprep.subr.mxu0 0.0
    %375 = vmatpush1.msra.mxu0 %v331
    %376 = vmatprep.subr.mxu0 0.0
    %377 = vmatpush1.msra.mxu0 %v332
    %378 = vmatprep.subr.mxu0 0.0
    %379 = vmatpush1.msra.mxu0 %v333
    %380 = vmatprep.subr.mxu0 0.0
    %381 = vmatpush1.msra.mxu0 %v334
    %382 = vmatprep.subr.mxu0 0.0
    %383 = vmatpush1.msra.mxu0 %v335
    %384 = vmatprep.subr.mxu0 0.0
    %385 = vmatpush1.msra.mxu0 %v336
    %386 = vmatprep.subr.mxu0 0.0
    %387 = vmatpush1.msra.mxu0 %v337
    %388 = vmatprep.subr.mxu0 0.0
    %389 = vmatpush1.msra.mxu0 %v338
    %390 = vmatprep.subr.mxu0 0.0
    %391 = vmatpush1.msra.mxu0 %v339
    %392 = vmatprep.subr.mxu0 0.0
    %393 = vmatpush1.msra.mxu0 %v340
    %394 = vmatprep.subr.mxu0 0.0
    %395 = vmatpush1.msra.mxu0 %v341
    %396 = vmatprep.subr.mxu0 0.0
    %397 = vmatpush1.msra.mxu0 %v342
    %398 = vmatprep.subr.mxu0 0.0
    %399 = vmatpush1.msra.mxu0 %v343
    %400 = vmatprep.subr.mxu0 0.0
    %401 = vmatpush1.msra.mxu0 %v344
    %402 = vmatprep.subr.mxu0 0.0
    %403 = vmatpush1.msra.mxu0 %v345
    %404 = vmatprep.subr.mxu0 0.0
    %405 = vmatpush1.msra.mxu0 %v346
    %406 = vmatprep.subr.mxu0 0.0
    %407 = vmatpush1.msra.mxu0 %v347
    %408 = vmatprep.subr.mxu0 0.0
    %409 = vmatpush1.msra.mxu0 %v348
    %410 = vmatprep.subr.mxu0 0.0
    %411 = vmatpush1.msra.mxu0 %v349
    %412 = vmatprep.subr.mxu0 0.0
    %413 = vmatpush1.msra.mxu0 %v350
    %414 = vmatprep.subr.mxu0 0.0
    %415 = vmatpush1.msra.mxu0 %v351
    %416 = vmatprep.subr.mxu0 0.0
    %417 = vmatpush1.msra.mxu0 %v352
    %418 = vmatprep.subr.mxu0 0.0
    %419 = vmatpush1.msra.mxu0 %v353
    %420 = vmatprep.subr.mxu0 0.0
    %421 = vmatpush1.msra.mxu0 %v354
    %422 = vmatprep.subr.mxu0 0.0
    %423 = vmatpush1.msra.mxu0 %v355
    %424 = vmatprep.subr.mxu0 0.0
    %425 = vmatpush1.msra.mxu0 %v356
    %426 = vmatprep.subr.mxu0 0.0
    %427 = vmatpush1.msra.mxu0 %v357
    %428 = vmatprep.subr.mxu0 0.0
    %429 = vmatpush1.msra.mxu0 %v358
    %430 = vmatprep.mubr.f32.mxu0 %v326
    %431 = vmatmul.mubr.f32.gmra.mrb[0].mxu0 %v325
    %v432 = vpop.f32.mrb[0].mxu0
    %v433 = vadd.f32 %v364, %v432
    %v434 = vpop.f32.mrb[0].mxu0
    %435 = vdwg.mxu0
    %v436 = vlaneseq
    %v437 = vand.u32 %v436, 127
    %vm438 = vcmp.ge.s32.totalorder %v437, 16
    %v439 = vsel %vm438, 1, 0
    %vm440 = vcmp.eq.s32.totalorder %v439, 1
    %v441 = vsel %vm440, %v433, 0.0
    %v442 = vmul.f32 %v441, 1.442695
    %v443 = vpow.pop %v442
    %v444 = vsel %vm440, %v443, %v433
    %445 = vst [vmem:[#allocation10] sm:$0xff] %v444
    // Predicated region
    $region46: #{tpu_custom_call.1} parent=1 // pred_check
      _
    $region47: #{tpu_custom_call.1} parent=1 // pred_check_branch
      %447 = sbr.rel (0) target = $region49
    $region48: #{tpu_custom_call.1} parent=1 // pred_region
      %s449 = ssub.s32 128, 128
      %450 = vsyncadd [#allocation4], %s449
      %s452 = sshll.u32 [#allocation10], 4
      %s453 = int_to_ptr.vmem [resolvable:$true] %s452
      %455 = dma.vmem_to_hbm [thread:$0]  %s453, 128, %s7, [#allocation4]
    $region49: #{tpu_custom_call.1} parent=1 // pred_fallthru
      _
    // Predicated region
    $region50: #{tpu_custom_call.1} parent=1 // pred_check
      _
    $region51: #{tpu_custom_call.1} parent=1 // pred_check_branch
      %457 = sbr.rel (0) target = $region53
    $region52: #{tpu_custom_call.1} parent=1 // pred_region
      %458 = dma.done [#allocation4], 128
    $region53: #{tpu_custom_call.1} parent=1 // pred_fallthru
      _
    %459 = vsyncpa [#allocation3], 1
    %460 = vsyncpa [#allocation6], 1
    %461 = vsyncpa [#allocation9], 1
    %462 = vsyncpa [#allocation4], 1

</llo_original>
